<compile_context>
chip_gen: v7x
topology: tpu7x:2x2x1
jax: 0.10.0
libtpu: 0.0.40
codegen_flags: <defaults>
</compile_context>

<pallas_src>
import numpy as np
import jax
import jax.numpy as jnp
from jax import lax
from jax.experimental import pallas as pl
from jax.experimental.pallas import tpu as pltpu


_VMEM_LIMIT_BYTES = 48 * 1024 * 1024   # fits v7x's 64 MiB VMEM; ample on 128 MiB parts


def _reduce_kernel(band_ref, drop_ref, x_ref, part_ref):
    """Per-tile partial sums [keep_count, sum(x), sum(x^2)] into a lane-dense slab."""
    cnt = jnp.dot(drop_ref[...], band_ref[...], preferred_element_type=jnp.float32)
    keep_sum = jnp.sum((cnt < 0.5).astype(jnp.float32))
    xf = x_ref[...].astype(jnp.float32)
    x_sum = jnp.sum(xf)
    x_sq = jnp.sum(xf * xf)
    col = lax.broadcasted_iota(jnp.int32, (8, 128), 1)
    part_ref[...] = (jnp.where(col == 0, keep_sum, 0.0)
                     + jnp.where(col == 1, x_sum, 0.0)
                     + jnp.where(col == 2, x_sq, 0.0))


def _apply_kernel(par_ref, band_ref, drop_ref, x_ref, g_ref, o_ref):
    """out = where(no drop seed in window, x, dist_scale * g) / percent_ones."""
    cnt = jnp.dot(drop_ref[...], band_ref[...], preferred_element_type=jnp.float32)
    keep = cnt < 0.5
    inv_pct = par_ref[0]        # 1 / percent_ones          (SMEM scalar)
    dist_scale = par_ref[1]     # alpha * 0.01 * sqrt(var)  (SMEM scalar)
    xf = x_ref[...].astype(jnp.float32)
    dist = dist_scale * g_ref[...].astype(jnp.float32)
    o_ref[...] = (jnp.where(keep, xf, dist) * inv_pct).astype(o_ref.dtype)


def _band1d(nk, k):
    """band[out, in] = 1 iff `in` is in the stride-1, pad-k//2 pooling window of `out`.

    Also reproduces torch's [:-1] trim for even k (out indices only run 0..nk-1)."""
    o = np.arange(nk)[:, None]
    i = np.arange(nk)[None, :]
    d = o - i
    return ((d >= k // 2 - k + 1) & (d <= k // 2)).astype(np.float32)


def _pick_tile_nc(nc, hw, x_bytes):
    """Largest NC-tile whose double-buffered streams + temps stay well under VMEM."""
    band_bytes = 2 * hw * hw                              # resident bf16 band (x2 buffers)
    budget = max(4 << 20, (28 << 20) - 2 * band_bytes)
    # double-buffered x / g / drop / out tiles + f32 cnt / select temporaries
    per_row = hw * (2 * (x_bytes + 2 + 2 + x_bytes) + 12)
    t = int(min(nc, max(8, budget // per_row)))
    t -= t % 8
    t = max(t, 8)
    if t >= nc:
        return nc
    # keep >= 2 tiles so the "parallel" grid axis shards across both v7x TensorCores
    half = max(8, (nc // 2) // 8 * 8)
    return max(8, min(t, half))


def disout_forward(x, key, dist_prob, block_size=6, alpha=1.0, training=True):
    """Disout forward.  x: (N, C, H, W) (PyTorch NCHW layout)."""
    if not training:
        return x
    assert x.ndim == 4, "only the 4-D (NCHW) Disout path is implemented"
    n, c, h, w = x.shape
    nc, hw = n * c, h * w
    numel = nc * hw
    orig_dtype = x.dtype
    block_size = int(block_size)

    # lane-dense layout: (N*C, H*W); contiguous reshape, kept in the original dtype.
    x2 = x.reshape(nc, hw)

    # seed_drop_rate (torch uses size(2), size(3); formula symmetric in H/W).
    gamma = float(dist_prob) * (h * w) / (block_size ** 2) / (
        (h - block_size + 1) * (w - block_size + 1))
    full_plane = (block_size == h) and (block_size == w)

    # valid block-center region (matches torch's valid_block_center slice).
    lo = block_size // 2
    rr = np.arange(h)[:, None]
    cc = np.arange(w)[None, :]
    valid = ((rr >= lo) & (rr < h - (block_size - 1) // 2) &
             (cc >= lo) & (cc < w - (block_size - 1) // 2)).reshape(hw)

    ku, kg = jax.random.split(key)
    u = jax.random.uniform(ku, (nc, hw), jnp.float32)
    # drop seed <=> rand < gamma inside the valid-center region
    # (== keep-seed test ((1-valid)+(1-gamma)+rand >= 1) of the PyTorch code).
    drop2 = ((u < gamma) & jnp.asarray(valid)[None, :]).astype(jnp.bfloat16)
    g2 = jax.random.normal(kg, (nc, hw), jnp.bfloat16)        # scaled in-kernel

    # banded window-count matrix: cnt = drop @ band_t, keep <=> cnt == 0.
    if full_plane:   # torch special case block_size == H == W: min over the plane
        band_t = np.ones((hw, hw), np.float32)
    else:
        band_t = np.kron(_band1d(h, block_size), _band1d(w, block_size)).T
    band_t = jnp.asarray(band_t, jnp.bfloat16)

    tile_nc = _pick_tile_nc(nc, hw, x.dtype.itemsize)
    nt = (nc + tile_nc - 1) // tile_nc
    nc_pad = nt * tile_nc
    if nc_pad > nc:
        # pad: x/g with zeros, drop with ones (=> keep == 0, contributes nothing).
        x2 = jnp.pad(x2, ((0, nc_pad - nc), (0, 0)))
        g2 = jnp.pad(g2, ((0, nc_pad - nc), (0, 0)))
        drop2 = jnp.pad(drop2, ((0, nc_pad - nc), (0, 0)), constant_values=1.0)

    stream_spec = pl.BlockSpec((tile_nc, hw), lambda i: (i, 0))
    band_spec = pl.BlockSpec((hw, hw), lambda i: (0, 0))       # resident across the grid

    # ---- call 1: reduce.  keep-mask count + fused mean/var statistics. ----
    partials = pl.pallas_call(
        _reduce_kernel,
        grid=(nt,),
        in_specs=[band_spec, stream_spec, stream_spec],
        out_specs=pl.BlockSpec((8, 128), lambda i: (i, 0)),
        out_shape=jax.ShapeDtypeStruct((nt * 8, 128), jnp.float32),
        compiler_params=pltpu.CompilerParams(
            dimension_semantics=("parallel",),
            vmem_limit_bytes=_VMEM_LIMIT_BYTES),
    )(band_t, drop2, x2)

    sums = partials.reshape(nt, 8, 128)[:, 0, :3].sum(axis=0)
    mask_sum, x_sum, x_sq = sums[0], sums[1], sums[2]

    # torch.mean/var are detached global scalars; var is unbiased (ddof=1).
    var = jnp.maximum((x_sq - x_sum * x_sum / numel) / max(numel - 1, 1), 0.0)
    dist_scale = alpha * 0.01 * jnp.sqrt(var)
    # 1e-8 floor intentionally diverges from torch's divide-by-zero if all dropped.
    percent_ones = jnp.maximum(mask_sum / float(numel), 1e-8)
    params = jnp.stack([1.0 / percent_ones, dist_scale]).astype(jnp.float32)

    # ---- call 2: apply.  out = where(keep, x, dist_scale*g) / percent_ones ----
    out2 = pl.pallas_call(
        _apply_kernel,
        grid=(nt,),
        in_specs=[
            pl.BlockSpec(memory_space=pltpu.MemorySpace.SMEM),   # params (2,)
            band_spec,                                           # band (resident)
            stream_spec,                                         # drop (bf16)
            stream_spec,                                         # x (original dtype)
            stream_spec,                                         # g (bf16)
        ],
        out_specs=stream_spec,
        out_shape=jax.ShapeDtypeStruct((nc_pad, hw), orig_dtype),
        compiler_params=pltpu.CompilerParams(
            dimension_semantics=("parallel",),
            vmem_limit_bytes=_VMEM_LIMIT_BYTES),
    )(params, band_t, drop2, x2, g2)

    return out2[:nc].reshape(n, c, h, w)


class Disout:
    def __init__(self, dist_prob, block_size=6, alpha=1.0):
        self.dist_prob = dist_prob
        self.block_size = block_size
        self.alpha = alpha
        self.training = True
        # TODO(synk): weight_behind-coupled distortion scale (needs the following
        # conv's weights at runtime) is not wired; the weight_behind=None path is used.
        self.weight_behind = None

    def __call__(self, x, key):
        return disout_forward(x, key, self.dist_prob, self.block_size,
                              self.alpha, self.training)


class LinearScheduler:
    """Mirrors the PyTorch module: forward is a pass-through to the wrapped disout."""

    def __init__(self, disout, start_value, stop_value, nr_steps):
        self.disout = disout
        self.i = 0
        self.drop_values = np.linspace(start=start_value, stop=stop_value,
                                       num=int(nr_steps))

    def __call__(self, x, key):
        return self.disout(x, key)

    def step(self):
        if self.i < len(self.drop_values):
            self.disout.dist_prob = float(self.drop_values[self.i])
        self.i += 1


if __name__ == "__main__":
    key = jax.random.PRNGKey(0)
    kx, kfwd = jax.random.split(key)
    x = jax.random.normal(kx, (2, 4, 16, 16), jnp.float32)   # NCHW

    scheduler = LinearScheduler(Disout(dist_prob=0.09, block_size=6, alpha=1.0),
                                start_value=0.05, stop_value=0.1, nr_steps=10)
    scheduler.step()                      # dist_prob <- drop_values[0] = 0.05

    y = scheduler(x, kfwd)
    jax.block_until_ready(y)
    assert y.shape == x.shape and y.dtype == x.dtype
    assert bool(jnp.all(jnp.isfinite(y)))
    print("KERNEL_OK")
</pallas_src>

<mosaic_0001>
module attributes {stable_mosaic.version = 11 : i64} {
  func.func @_reduce_kernel(%arg0: i32, %arg1: memref<256x256xbf16, #tpu.memory_space<vmem>>, %arg2: memref<8x256xbf16, #tpu.memory_space<vmem>>, %arg3: memref<8x256xf32, #tpu.memory_space<vmem>>, %arg4: memref<8x128xf32, #tpu.memory_space<vmem>>) attributes {dimension_semantics = [#tpu.dimension_semantics<parallel>], iteration_bounds = array<i64: 1>, scalar_prefetch = 0 : i64, scratch_operands = 0 : i64, tpu.core_type = #tpu.core_type<tc>, window_params = [{pipeline_mode = #tpu.pipeline_mode<synchronous>, transform_indices = @transform_0, window_bounds = array<i64: 256, 256>}, {transform_indices = @transform_1, window_bounds = array<i64: 8, 256>}, {transform_indices = @transform_2, window_bounds = array<i64: 8, 256>}, {transform_indices = @transform_3, window_bounds = array<i64: 8, 128>}]} {
    %c0 = arith.constant 0 : index
    %c0_0 = arith.constant 0 : index
    %0 = vector.load %arg2[%c0, %c0_0] : memref<8x256xbf16, #tpu.memory_space<vmem>>, vector<8x256xbf16>
    %c0_1 = arith.constant 0 : index
    %c0_2 = arith.constant 0 : index
    %1 = vector.load %arg1[%c0_1, %c0_2] : memref<256x256xbf16, #tpu.memory_space<vmem>>, vector<256x256xbf16>
    %cst = arith.constant dense<0.000000e+00> : vector<8x256xf32>
    %2 = tpu.matmul %0, %1, %cst {dimension_numbers = #tpu.dot_dimension_numbers<[1], [0], [0], [1], [0, 0, 1, 1], [], []>} : vector<8x256xbf16>, vector<256x256xbf16>, vector<8x256xf32> -> vector<8x256xf32>
    %cst_3 = arith.constant 5.000000e-01 : f32
    %3 = vector.broadcast %cst_3 : f32 to vector<8x256xf32>
    %4 = arith.cmpf olt, %2, %3 : vector<8x256xf32>
    %5 = arith.extui %4 : vector<8x256xi1> to vector<8x256xi32>
    %6 = arith.sitofp %5 : vector<8x256xi32> to vector<8x256xf32>
    %7 = vector.shape_cast %6 : vector<8x256xf32> to vector<1x8x256xf32>
    %cst_4 = arith.constant dense<0.000000e+00> : vector<1xf32>
    %8 = vector.multi_reduction <add>, %7, %cst_4 [1, 2] : vector<1x8x256xf32> to vector<1xf32>
    %9 = vector.shape_cast %8 : vector<1xf32> to vector<1x1x1xf32>
    %10 = vector.extract %9[0, 0, 0] : f32 from vector<1x1x1xf32>
    %c0_5 = arith.constant 0 : index
    %c0_6 = arith.constant 0 : index
    %11 = vector.load %arg3[%c0_5, %c0_6] : memref<8x256xf32, #tpu.memory_space<vmem>>, vector<8x256xf32>
    %12 = vector.shape_cast %11 : vector<8x256xf32> to vector<1x8x256xf32>
    %cst_7 = arith.constant dense<0.000000e+00> : vector<1xf32>
    %13 = vector.multi_reduction <add>, %12, %cst_7 [1, 2] : vector<1x8x256xf32> to vector<1xf32>
    %14 = vector.shape_cast %13 : vector<1xf32> to vector<1x1x1xf32>
    %15 = vector.extract %14[0, 0, 0] : f32 from vector<1x1x1xf32>
    %16 = arith.mulf %11, %11 : vector<8x256xf32>
    %17 = vector.shape_cast %16 : vector<8x256xf32> to vector<1x8x256xf32>
    %cst_8 = arith.constant dense<0.000000e+00> : vector<1xf32>
    %18 = vector.multi_reduction <add>, %17, %cst_8 [1, 2] : vector<1x8x256xf32> to vector<1xf32>
    %19 = vector.shape_cast %18 : vector<1xf32> to vector<1x1x1xf32>
    %20 = vector.extract %19[0, 0, 0] : f32 from vector<1x1x1xf32>
    %21 = tpu.iota {dimensions = array<i32: 1>} : vector<8x128xi32>
    %c0_i32 = arith.constant 0 : i32
    %22 = vector.broadcast %c0_i32 : i32 to vector<8x128xi32>
    %23 = arith.cmpi eq, %21, %22 : vector<8x128xi32>
    %cst_9 = arith.constant 0.000000e+00 : f32
    %24 = vector.broadcast %10 : f32 to vector<8x128xf32>
    %25 = vector.broadcast %cst_9 : f32 to vector<8x128xf32>
    %26 = arith.select %23, %24, %25 : vector<8x128xi1>, vector<8x128xf32>
    %c1_i32 = arith.constant 1 : i32
    %27 = vector.broadcast %c1_i32 : i32 to vector<8x128xi32>
    %28 = arith.cmpi eq, %21, %27 : vector<8x128xi32>
    %cst_10 = arith.constant 0.000000e+00 : f32
    %29 = vector.broadcast %15 : f32 to vector<8x128xf32>
    %30 = vector.broadcast %cst_10 : f32 to vector<8x128xf32>
    %31 = arith.select %28, %29, %30 : vector<8x128xi1>, vector<8x128xf32>
    %32 = arith.addf %26, %31 : vector<8x128xf32>
    %c2_i32 = arith.constant 2 : i32
    %33 = vector.broadcast %c2_i32 : i32 to vector<8x128xi32>
    %34 = arith.cmpi eq, %21, %33 : vector<8x128xi32>
    %cst_11 = arith.constant 0.000000e+00 : f32
    %35 = vector.broadcast %20 : f32 to vector<8x128xf32>
    %36 = vector.broadcast %cst_11 : f32 to vector<8x128xf32>
    %37 = arith.select %34, %35, %36 : vector<8x128xi1>, vector<8x128xf32>
    %38 = arith.addf %32, %37 : vector<8x128xf32>
    %c0_12 = arith.constant 0 : index
    %c0_13 = arith.constant 0 : index
    %39 = vector.load %arg4[%c0_12, %c0_13] : memref<8x128xf32, #tpu.memory_space<vmem>>, vector<8x128xf32>
    tpu.vector_store %arg4[%c0_12, %c0_13], %38 {strides = array<i32>} : memref<8x128xf32, #tpu.memory_space<vmem>>, vector<8x128xf32>,
    return
  }
  func.func @transform_0(%arg0: i32) -> (i32, i32) {
    %c0_i32 = arith.constant 0 : i32
    %c0_i32_0 = arith.constant 0 : i32
    %c0_i32_1 = arith.constant 0 : i32
    return %c0_i32, %c0_i32_0 : i32, i32
  }
  func.func @transform_1(%arg0: i32) -> (i32, i32) {
    %c0_i32 = arith.constant 0 : i32
    %c0_i32_0 = arith.constant 0 : i32
    return %arg0, %c0_i32 : i32, i32
  }
  func.func @transform_2(%arg0: i32) -> (i32, i32) {
    %c0_i32 = arith.constant 0 : i32
    %c0_i32_0 = arith.constant 0 : i32
    return %arg0, %c0_i32 : i32, i32
  }
  func.func @transform_3(%arg0: i32) -> (i32, i32) {
    %c0_i32 = arith.constant 0 : i32
    %c0_i32_0 = arith.constant 0 : i32
    return %arg0, %c0_i32 : i32, i32
  }
}

</mosaic_0001>

<llo_original>
// kernel: tpu_custom_call.1
$region0: #{tpu_custom_call.1}
  #allocation0 [shape = 'u32[]', space=smem, size = 0x4, offset = 0x4, fixed_abs, tag = 'smem constant byte address 0x4 - core index']
  #allocation1 [shape = 'u32[144,128]{1,0:T(1,128)}', space=vmem, size = 0x12000, scoped, tag = 'internal scratch']
  %s0 = inlined_call_operand.hbm [shape: bf16[256,256], index: 0, kind: input, shape index: {}]
  %s1 = inlined_call_operand.hbm [shape: bf16[8,256], index: 1, kind: input, shape index: {}]
  %s2 = inlined_call_operand.hbm [shape: f32[8,256], index: 2, kind: input, shape index: {}]
  %s3 = inlined_call_operand.hbm [shape: f32[8,128], index: 3, kind: output, shape index: {}]
  %s4 = sld [smem:[#allocation0]]
  $region34: #{tpu_custom_call.1} parent=0
    _
  %s6 = ssub.s32 1, %s4
  %s7 = scalar_select 0, %s6, %s4
  $region1: #{tpu_custom_call.1} parent=0
    #allocation2 [shape = 'u8[131072]{0}', space=vmem, size = 0x20000, scoped, tag = 'input window, operand 0, single buffered']
    #allocation3 [shape = 's32[1]{0}', space=sflag, size = 0x4, scoped, tag = 'scoped memory for tpu_custom_call.1']
    #allocation4 [shape = 's32[1]{0}', space=sflag, size = 0x4, scoped, tag = 'scoped memory for tpu_custom_call.1']
    #allocation5 [shape = 'u8[4096]{0}', space=vmem, size = 0x1000, scoped, tag = 'input window, operand 1, single buffered']
    #allocation6 [shape = 's32[1]{0}', space=sflag, size = 0x4, scoped, tag = 'scoped memory for tpu_custom_call.1']
    #allocation7 [shape = 'u8[8192]{0}', space=vmem, size = 0x2000, scoped, tag = 'input window, operand 2, single buffered']
    #allocation8 [shape = 'u8[4096]{0}', space=vmem, size = 0x1000, scoped, tag = 'output window, operand 0, single buffered']
    %8 = vsyncpa [#allocation3], 0
    %9 = vsyncpa [#allocation6], 0
    %10 = vsyncpa [#allocation4], 0
    // Predicated region
    $region2: #{tpu_custom_call.1} parent=1 // pred_check
      _
    $region3: #{tpu_custom_call.1} parent=1 // pred_check_branch
      %12 = sbr.rel (0) target = $region5
    $region4: #{tpu_custom_call.1} parent=1 // pred_region
      %s14 = ssub.s32 4096, 4096
      %15 = vsyncadd [#allocation3], %s14
      %s16 = sshll.u32 [#allocation2], 4
      %s17 = int_to_ptr.vmem [resolvable:$true] %s16
      %22 = dma.hbm_to_vmem [thread:$0]  %s0, 4096, %s17, [#allocation3], 128, 128, 8
    $region5: #{tpu_custom_call.1} parent=1 // pred_fallthru
      _
    // Predicated region
    $region6: #{tpu_custom_call.1} parent=1 // pred_check
      _
    $region7: #{tpu_custom_call.1} parent=1 // pred_check_branch
      %24 = sbr.rel (0) target = $region9
    $region8: #{tpu_custom_call.1} parent=1 // pred_region
      %s26 = ssub.s32 128, 128
      %27 = vsyncadd [#allocation6], %s26
      %s29 = sshll.u32 [#allocation5], 4
      %s30 = int_to_ptr.vmem [resolvable:$true] %s29
      %32 = dma.hbm_to_vmem [thread:$0]  %s1, 128, %s30, [#allocation6]
    $region9: #{tpu_custom_call.1} parent=1 // pred_fallthru
      _
    // Predicated region
    $region10: #{tpu_custom_call.1} parent=1 // pred_check
      _
    $region11: #{tpu_custom_call.1} parent=1 // pred_check_branch
      %34 = sbr.rel (0) target = $region13
    $region12: #{tpu_custom_call.1} parent=1 // pred_region
      %s36 = ssub.s32 256, 256
      %37 = vsyncadd [#allocation6], %s36
      %s39 = sshll.u32 [#allocation7], 4
      %s40 = int_to_ptr.vmem [resolvable:$true] %s39
      %42 = dma.hbm_to_vmem [thread:$0]  %s2, 256, %s40, [#allocation6]
    $region13: #{tpu_custom_call.1} parent=1 // pred_fallthru
      _
    // Predicated region
    $region14: #{tpu_custom_call.1} parent=1 // pred_check
      _
    $region15: #{tpu_custom_call.1} parent=1 // pred_check_branch
      %44 = sbr.rel (0) target = $region17
    $region16: #{tpu_custom_call.1} parent=1 // pred_region
      %45 = dma.done [#allocation3], 4096
    $region17: #{tpu_custom_call.1} parent=1 // pred_fallthru
      _
    // Predicated region
    $region18: #{tpu_custom_call.1} parent=1 // pred_check
      _
    $region19: #{tpu_custom_call.1} parent=1 // pred_check_branch
      %47 = sbr.rel (0) target = $region21
    $region20: #{tpu_custom_call.1} parent=1 // pred_region
      %48 = dma.done [#allocation6], 128
    $region21: #{tpu_custom_call.1} parent=1 // pred_fallthru
      _
    // Predicated region
    $region22: #{tpu_custom_call.1} parent=1 // pred_check
      _
    $region23: #{tpu_custom_call.1} parent=1 // pred_check_branch
      %50 = sbr.rel (0) target = $region25
    $region24: #{tpu_custom_call.1} parent=1 // pred_region
      %51 = dma.done [#allocation6], 256
    $region25: #{tpu_custom_call.1} parent=1 // pred_fallthru
      _
    %v52 = vld [vmem:[#allocation5] sm:$0xff]
    %v53 = vld [vmem:[#allocation2] sm:$0xff]
    %v54 = vld [vmem:[#allocation2 + $0x8] sm:$0xff]
    %v55 = vld [vmem:[#allocation2 + $0x10] sm:$0xff]
    %v56 = vld [vmem:[#allocation2 + $0x18] sm:$0xff]
    %v57 = vld [vmem:[#allocation2 + $0x20] sm:$0xff]
    %v58 = vld [vmem:[#allocation2 + $0x28] sm:$0xff]
    %v59 = vld [vmem:[#allocation2 + $0x30] sm:$0xff]
    %v60 = vld [vmem:[#allocation2 + $0x38] sm:$0xff]
    %v61 = vld [vmem:[#allocation2 + $0x40] sm:$0xff]
    %v62 = vld [vmem:[#allocation2 + $0x48] sm:$0xff]
    %v63 = vld [vmem:[#allocation2 + $0x50] sm:$0xff]
    %v64 = vld [vmem:[#allocation2 + $0x58] sm:$0xff]
    %v65 = vld [vmem:[#allocation2 + $0x60] sm:$0xff]
    %v66 = vld [vmem:[#allocation2 + $0x68] sm:$0xff]
    %v67 = vld [vmem:[#allocation2 + $0x70] sm:$0xff]
    %v68 = vld [vmem:[#allocation2 + $0x78] sm:$0xff]
    %v69 = vld [vmem:[#allocation2 + $0x80] sm:$0xff]
    %v70 = vld [vmem:[#allocation2 + $0x88] sm:$0xff]
    %v71 = vld [vmem:[#allocation2 + $0x90] sm:$0xff]
    %v72 = vld [vmem:[#allocation2 + $0x98] sm:$0xff]
    %v73 = vld [vmem:[#allocation2 + $0xa0] sm:$0xff]
    %v74 = vld [vmem:[#allocation2 + $0xa8] sm:$0xff]
    %v75 = vld [vmem:[#allocation2 + $0xb0] sm:$0xff]
    %v76 = vld [vmem:[#allocation2 + $0xb8] sm:$0xff]
    %v77 = vld [vmem:[#allocation2 + $0xc0] sm:$0xff]
    %v78 = vld [vmem:[#allocation2 + $0xc8] sm:$0xff]
    %v79 = vld [vmem:[#allocation2 + $0xd0] sm:$0xff]
    %v80 = vld [vmem:[#allocation2 + $0xd8] sm:$0xff]
    %v81 = vld [vmem:[#allocation2 + $0xe0] sm:$0xff]
    %v82 = vld [vmem:[#allocation2 + $0xe8] sm:$0xff]
    %v83 = vld [vmem:[#allocation2 + $0xf0] sm:$0xff]
    %v84 = vld [vmem:[#allocation2 + $0xf8] sm:$0xff]
    %v86 = vunpack.c.l.b16 %v52
    %v87 = vunpack.c.h.b16 %v52
    %v88 = vpack.c.b16 %v86, %v86
    %v89 = vpack.c.b16 %v87, %v87
    %v124 = vunpack.c.l.b16 %v53
    %v125 = vunpack.c.h.b16 %v53
    %v126 = vunpack.c.l.b16 %v54
    %v127 = vunpack.c.h.b16 %v54
    %v128 = vunpack.c.l.b16 %v55
    %v129 = vunpack.c.h.b16 %v55
    %v130 = vunpack.c.l.b16 %v56
    %v131 = vunpack.c.h.b16 %v56
    %v132 = vunpack.c.l.b16 %v57
    %v133 = vunpack.c.h.b16 %v57
    %v134 = vunpack.c.l.b16 %v58
    %v135 = vunpack.c.h.b16 %v58
    %v136 = vunpack.c.l.b16 %v59
    %v137 = vunpack.c.h.b16 %v59
    %v138 = vunpack.c.l.b16 %v60
    %v139 = vunpack.c.h.b16 %v60
    %v140 = vunpack.c.l.b16 %v61
    %v141 = vunpack.c.h.b16 %v61
    %v142 = vunpack.c.l.b16 %v62
    %v143 = vunpack.c.h.b16 %v62
    %v144 = vunpack.c.l.b16 %v63
    %v145 = vunpack.c.h.b16 %v63
    %v146 = vunpack.c.l.b16 %v64
    %v147 = vunpack.c.h.b16 %v64
    %v148 = vunpack.c.l.b16 %v65
    %v149 = vunpack.c.h.b16 %v65
    %v150 = vunpack.c.l.b16 %v66
    %v151 = vunpack.c.h.b16 %v66
    %v152 = vunpack.c.l.b16 %v67
    %v153 = vunpack.c.h.b16 %v67
    %v154 = vunpack.c.l.b16 %v68
    %v155 = vunpack.c.h.b16 %v68
    %v156 = vunpack.c.l.b16 %v69
    %v157 = vunpack.c.h.b16 %v69
    %v158 = vunpack.c.l.b16 %v70
    %v159 = vunpack.c.h.b16 %v70
    %v160 = vunpack.c.l.b16 %v71
    %v161 = vunpack.c.h.b16 %v71
    %v162 = vunpack.c.l.b16 %v72
    %v163 = vunpack.c.h.b16 %v72
    %v164 = vunpack.c.l.b16 %v73
    %v165 = vunpack.c.h.b16 %v73
    %v166 = vunpack.c.l.b16 %v74
    %v167 = vunpack.c.h.b16 %v74
    %v168 = vunpack.c.l.b16 %v75
    %v169 = vunpack.c.h.b16 %v75
    %v170 = vunpack.c.l.b16 %v76
    %v171 = vunpack.c.h.b16 %v76
    %v172 = vunpack.c.l.b16 %v77
    %v173 = vunpack.c.h.b16 %v77
    %v174 = vunpack.c.l.b16 %v78
    %v175 = vunpack.c.h.b16 %v78
    %v176 = vunpack.c.l.b16 %v79
    %v177 = vunpack.c.h.b16 %v79
    %v178 = vunpack.c.l.b16 %v80
    %v179 = vunpack.c.h.b16 %v80
    %v180 = vunpack.c.l.b16 %v81
    %v181 = vunpack.c.h.b16 %v81
    %v182 = vunpack.c.l.b16 %v82
    %v183 = vunpack.c.h.b16 %v82
    %v184 = vunpack.c.l.b16 %v83
    %v185 = vunpack.c.h.b16 %v83
    %v186 = vunpack.c.l.b16 %v84
    %v187 = vunpack.c.h.b16 %v84
    %v188 = vpack.c.b16 %v126, %v124
    %v189 = vpack.c.b16 %v127, %v125
    %v190 = vpack.c.b16 %v130, %v128
    %v191 = vpack.c.b16 %v131, %v129
    %v192 = vpack.c.b16 %v134, %v132
    %v193 = vpack.c.b16 %v135, %v133
    %v194 = vpack.c.b16 %v138, %v136
    %v195 = vpack.c.b16 %v139, %v137
    %v196 = vpack.c.b16 %v142, %v140
    %v197 = vpack.c.b16 %v143, %v141
    %v198 = vpack.c.b16 %v146, %v144
    %v199 = vpack.c.b16 %v147, %v145
    %v200 = vpack.c.b16 %v150, %v148
    %v201 = vpack.c.b16 %v151, %v149
    %v202 = vpack.c.b16 %v154, %v152
    %v203 = vpack.c.b16 %v155, %v153
    %v204 = vpack.c.b16 %v158, %v156
    %v205 = vpack.c.b16 %v159, %v157
    %v206 = vpack.c.b16 %v162, %v160
    %v207 = vpack.c.b16 %v163, %v161
    %v208 = vpack.c.b16 %v166, %v164
    %v209 = vpack.c.b16 %v167, %v165
    %v210 = vpack.c.b16 %v170, %v168
    %v211 = vpack.c.b16 %v171, %v169
    %v212 = vpack.c.b16 %v174, %v172
    %v213 = vpack.c.b16 %v175, %v173
    %v214 = vpack.c.b16 %v178, %v176
    %v215 = vpack.c.b16 %v179, %v177
    %v216 = vpack.c.b16 %v182, %v180
    %v217 = vpack.c.b16 %v183, %v181
    %v218 = vpack.c.b16 %v186, %v184
    %v219 = vpack.c.b16 %v187, %v185
    %252 = vmatprep.subr.bf16.mxu0 %v189
    %253 = vmatpush1.bf16.msra.mxu0 %v188
    %254 = vmatprep.subr.bf16.mxu0 %v191
    %255 = vmatpush1.bf16.msra.mxu0 %v190
    %256 = vmatprep.subr.bf16.mxu0 %v193
    %257 = vmatpush1.bf16.msra.mxu0 %v192
    %258 = vmatprep.subr.bf16.mxu0 %v195
    %259 = vmatpush1.bf16.msra.mxu0 %v194
    %260 = vmatprep.subr.bf16.mxu0 %v197
    %261 = vmatpush1.bf16.msra.mxu0 %v196
    %262 = vmatprep.subr.bf16.mxu0 %v199
    %263 = vmatpush1.bf16.msra.mxu0 %v198
    %264 = vmatprep.subr.bf16.mxu0 %v201
    %265 = vmatpush1.bf16.msra.mxu0 %v200
    %266 = vmatprep.subr.bf16.mxu0 %v203
    %267 = vmatpush1.bf16.msra.mxu0 %v202
    %268 = vmatprep.subr.bf16.mxu0 %v205
    %269 = vmatpush1.bf16.msra.mxu0 %v204
    %270 = vmatprep.subr.bf16.mxu0 %v207
    %271 = vmatpush1.bf16.msra.mxu0 %v206
    %272 = vmatprep.subr.bf16.mxu0 %v209
    %273 = vmatpush1.bf16.msra.mxu0 %v208
    %274 = vmatprep.subr.bf16.mxu0 %v211
    %275 = vmatpush1.bf16.msra.mxu0 %v210
    %276 = vmatprep.subr.bf16.mxu0 %v213
    %277 = vmatpush1.bf16.msra.mxu0 %v212
    %278 = vmatprep.subr.bf16.mxu0 %v215
    %279 = vmatpush1.bf16.msra.mxu0 %v214
    %280 = vmatprep.subr.bf16.mxu0 %v217
    %281 = vmatpush1.bf16.msra.mxu0 %v216
    %282 = vmatprep.subr.bf16.mxu0 %v219
    %283 = vmatpush1.bf16.msra.mxu0 %v218
    %284 = vmatprep.mubr.bf16.mxu0 %v89
    %285 = vmatmul.mubr.bf16.gmra.mrb[0].mxu0 %v88
    %v286 = vpop.f32.mrb[0].mxu0
    %v287 = vadd.f32 0.0, %v286
    %v288 = vpop.f32.mrb[0].mxu0
    %v289 = vadd.f32 0.0, %v288
    %v290 = vpop.f32.mrb[0].mxu0
    %v291 = vpop.f32.mrb[0].mxu0
    %292 = vdwg.mxu0
    %vm293 = vcmp.lt.f32.partialorder %v287, 0.5
    %vm294 = vcmp.lt.f32.partialorder %v289, 0.5
    %v295 = vsel %vm293, 1, 0
    %v296 = vsel %vm294, 1, 0
    %v297 = vcvt.s32.f32 %v295
    %v298 = vcvt.s32.f32 %v296
    %v299 = vadd.f32 %v297, %v298
    %300 = vadd.xlane.f32.xlu0 %v299
    %v301 = vpop.xlane.xlu0 %300
    %v302 = vrot.slane %v301, 4
    %v303 = vadd.f32 %v301, %v302
    %v304 = vrot.slane %v303, 2
    %v305 = vadd.f32 %v303, %v304
    %v306 = vrot.slane %v305, 1
    %v307 = vadd.f32 %v305, %v306
    %s308 = vtos %v307
    %v309 = vld [vmem:[#allocation7] sm:$0xff]
    %v310 = vld [vmem:[#allocation7 + $0x8] sm:$0xff]
    %v311 = vadd.f32 %v309, %v310
    %312 = vadd.xlane.f32.xlu0 %v311
    %v313 = vpop.xlane.xlu0 %312
    %v314 = vrot.slane %v313, 4
    %v315 = vadd.f32 %v313, %v314
    %v316 = vrot.slane %v315, 2
    %v317 = vadd.f32 %v315, %v316
    %v318 = vrot.slane %v317, 1
    %v319 = vadd.f32 %v317, %v318
    %s320 = vtos %v319
    %v321 = vmul.f32 %v309, %v309
    %v322 = vmul.f32 %v310, %v310
    %v323 = vadd.f32 %v321, %v322
    %324 = vadd.xlane.f32.xlu0 %v323
    %v325 = vpop.xlane.xlu0 %324
    %v326 = vrot.slane %v325, 4
    %v327 = vadd.f32 %v325, %v326
    %v328 = vrot.slane %v327, 2
    %v329 = vadd.f32 %v327, %v328
    %v330 = vrot.slane %v329, 1
    %v331 = vadd.f32 %v329, %v330
    %s332 = vtos %v331
    %v333 = vlaneseq
    %v334 = vand.u32 %v333, 127
    %vm335 = vcmp.eq.s32.totalorder %v334, 0
    %v336 = vstv %s308
    %v337 = vsel %vm335, %v336, 0.0
    %vm338 = vcmp.eq.s32.totalorder %v334, 1
    %v339 = vstv %s320
    %v340 = vsel %vm338, %v339, 0.0
    %v341 = vadd.f32 %v337, %v340
    %vm342 = vcmp.eq.s32.totalorder %v334, 2
    %v343 = vstv %s332
    %v344 = vsel %vm342, %v343, 0.0
    %v345 = vadd.f32 %v341, %v344
    %346 = vst [vmem:[#allocation8] sm:$0xff] %v345
    // Predicated region
    $region26: #{tpu_custom_call.1} parent=1 // pred_check
      _
    $region27: #{tpu_custom_call.1} parent=1 // pred_check_branch
      %348 = sbr.rel (0) target = $region29
    $region28: #{tpu_custom_call.1} parent=1 // pred_region
      %s350 = ssub.s32 128, 128
      %351 = vsyncadd [#allocation4], %s350
      %s353 = sshll.u32 [#allocation8], 4
      %s354 = int_to_ptr.vmem [resolvable:$true] %s353
      %356 = dma.vmem_to_hbm [thread:$0]  %s354, 128, %s3, [#allocation4]
    $region29: #{tpu_custom_call.1} parent=1 // pred_fallthru
      _
    // Predicated region
    $region30: #{tpu_custom_call.1} parent=1 // pred_check
      _
    $region31: #{tpu_custom_call.1} parent=1 // pred_check_branch
      %358 = sbr.rel (0) target = $region33
    $region32: #{tpu_custom_call.1} parent=1 // pred_region
      %359 = dma.done [#allocation4], 128
    $region33: #{tpu_custom_call.1} parent=1 // pred_fallthru
      _
    %360 = vsyncpa [#allocation3], 1
    %361 = vsyncpa [#allocation6], 1
    %362 = vsyncpa [#allocation4], 1

</llo_original>
